<compile_context>
chip_gen: v7x
topology: tpu7x:2x2x1
jax: 0.10.0
libtpu: 0.0.40
codegen_flags: <defaults>
</compile_context>

<pallas_src>
import functools
import math

import numpy as np
import jax
import jax.numpy as jnp
from jax.experimental import pallas as pl
from jax.experimental.pallas import tpu as pltpu

_LANES = 128
_CHUNK = 16          # strip-mine granule: one bf16-packed vreg (16 sublanes x 128 lanes)
_N_CH = 11           # conf, cx, cy, ang, len, bp0x, bp0y, bp1x, bp1y, obj, mask


def _round_up(x, m):
    return ((x + m - 1) // m) * m


# -----------------------------------------------------------------------------
# Pallas kernel: endpoint decode + Hausdorff distance + masked-sum reductions
# -----------------------------------------------------------------------------
def _hausdorff_sums_kernel(slab_ref, out_ref, acc_d, acc_o, acc_a, *,
                           img_w, img_h, n_chunks):
    t = pl.program_id(1)          # "arbitrary" tile axis (axis 0 is the core split)

    @pl.when(t == 0)
    def _init():
        acc_d[...] = jnp.zeros_like(acc_d)
        acc_o[...] = jnp.zeros_like(acc_o)
        acc_a[...] = jnp.zeros_like(acc_a)

    # Strip-mine the elementwise chain over 16-row sub-chunks so all
    # temporaries are single vregs (no spills at large block_rows).
    @pl.loop(0, n_chunks)
    def _chunk(c):
        r0 = pl.multiple_of(c * _CHUNK, _CHUNK)

        def rd(ch):
            return slab_ref[ch, pl.ds(r0, _CHUNK), :].astype(jnp.float32)

        conf = rd(0)
        cx = rd(1) * img_w
        cy = rd(2) * img_h
        angle = rd(3) * math.pi
        length = rd(4) * img_w
        bp0x = rd(5)
        bp0y = rd(6)
        bp1x = rd(7)
        bp1y = rd(8)
        obj = rd(9)
        mask = rd(10)

        half_dx = length * jnp.cos(angle) * 0.5
        half_dy = length * jnp.sin(angle) * 0.5
        p0x = cx - half_dx
        p0y = cy - half_dy
        p1x = cx + half_dx
        p1y = cy + half_dy

        def sqd(ax, ay, bx, by):
            dx = ax - bx
            dy = ay - by
            return dx * dx + dy * dy

        s00 = sqd(p0x, p0y, bp0x, bp0y)
        s01 = sqd(p0x, p0y, bp1x, bp1y)
        s10 = sqd(p1x, p1y, bp0x, bp0y)
        s11 = sqd(p1x, p1y, bp1x, bp1y)

        # same terms as torch.max(torch.stack(...)); sqrt is monotone so take
        # max-of-min on squares and sqrt once.
        hd_sq = jnp.maximum(
            jnp.maximum(jnp.minimum(s00, s01), jnp.minimum(s10, s11)),
            jnp.maximum(jnp.minimum(s00, s10), jnp.minimum(s01, s11)))
        acc_d[...] += mask * jnp.sqrt(hd_sq)

        # MSE terms, factored (mask is 0/1; padded rows have conf=obj=mask=0)
        diff = conf - obj
        sq = diff * diff
        acc_a[...] += sq
        acc_o[...] += mask * sq

    @pl.when(t == pl.num_programs(1) - 1)
    def _finalize():
        sum_d = jnp.sum(acc_d[...])
        sum_o = jnp.sum(acc_o[...])
        sum_a = jnp.sum(acc_a[...])
        row = jax.lax.broadcasted_iota(jnp.int32, (8, _LANES), 0)
        col = jax.lax.broadcasted_iota(jnp.int32, (8, _LANES), 1)
        out = jnp.where(
            (row == 0) & (col == 0), sum_d,
            jnp.where((row == 0) & (col == 1), sum_o,
                      jnp.where((row == 0) & (col == 2), sum_a, 0.0)))
        out_ref[...] = out


# -----------------------------------------------------------------------------
# Wrapper: relayout + pallas_call + weight / mean scaling
# -----------------------------------------------------------------------------
def hausdorff_loss_pallas(pred, best_pts, objectness, objects_mask, *,
                          image_size, objectness_weight, no_objectness_weight,
                          regression_weight, block_rows=2048,
                          input_dtype=jnp.bfloat16):
    """pred: (B, C, A, 5); best_pts: (B, C, A, 4); objectness/mask: (B, C, A, 1)."""
    B, C, A, _ = pred.shape
    N = B * C * A
    itemsize = jnp.dtype(input_dtype).itemsize

    # --- generation-aware VMEM budget (v7x has 64 MiB vs 128 MiB on v5e/v6e) ---
    try:
        vmem_cap = int(pltpu.get_tpu_info().vmem_capacity_bytes)
    except Exception:  # be conservative if the query is unavailable
        vmem_cap = 64 * 1024 * 1024
    vmem_budget = min(vmem_cap // 2, 40 * 1024 * 1024)

    bytes_per_row = _N_CH * _LANES * itemsize          # all channels, 1 row of 128 anchors
    max_block_rows = max(
        _CHUNK,
        ((vmem_budget - 2 * 1024 * 1024) // (2 * bytes_per_row)) // _CHUNK * _CHUNK)

    rows = pl.cdiv(N, _LANES)
    rows_c = _round_up(rows, _CHUNK)
    block_rows = max(_CHUNK, _round_up(min(block_rows, max_block_rows, rows_c), _CHUNK))

    num_tiles = pl.cdiv(rows_c, block_rows)
    n_core_splits = 2 if num_tiles >= 2 else 1         # v7x megacore split (harmless on 1-TC)
    tiles_per_core = pl.cdiv(num_tiles, n_core_splits)
    num_tiles = n_core_splits * tiles_per_core
    rows_p = num_tiles * block_rows
    Np = rows_p * _LANES

    # --- single fused relayout: (N, 11) -> bf16 -> (11, rows_p, 128) ---
    feats = jnp.concatenate(
        [pred.reshape(N, 5).astype(jnp.float32),
         best_pts.reshape(N, 4).astype(jnp.float32),
         objectness.reshape(N, 1).astype(jnp.float32),
         objects_mask.reshape(N, 1).astype(jnp.float32)], axis=1)
    slab = jnp.pad(jnp.transpose(feats.astype(input_dtype)),
                   ((0, 0), (0, Np - N))).reshape(_N_CH, rows_p, _LANES)

    kernel = functools.partial(
        _hausdorff_sums_kernel,
        img_w=float(image_size[0]), img_h=float(image_size[1]),
        n_chunks=block_rows // _CHUNK)

    block_bytes = _N_CH * block_rows * _LANES * itemsize
    vmem_limit = int(min(vmem_budget,
                         max(16 * 1024 * 1024, 2 * block_bytes + 4 * 1024 * 1024)))

    grid_spec = pltpu.PrefetchScalarGridSpec(
        num_scalar_prefetch=0,
        grid=(n_core_splits, tiles_per_core),
        in_specs=[
            pl.BlockSpec((_N_CH, block_rows, _LANES),
                         lambda p, t: (0, p * tiles_per_core + t, 0)),
        ],
        out_specs=pl.BlockSpec((8, _LANES), lambda p, t: (p, 0)),
        scratch_shapes=[pltpu.VMEM((_CHUNK, _LANES), jnp.float32)] * 3,
    )

    out = pl.pallas_call(
        kernel,
        out_shape=jax.ShapeDtypeStruct((n_core_splits * 8, _LANES), jnp.float32),
        grid_spec=grid_spec,
        compiler_params=pltpu.CompilerParams(
            dimension_semantics=("parallel", "arbitrary"),
            vmem_limit_bytes=vmem_limit),
    )(slab)

    parts = out.reshape(n_core_splits, 8, _LANES)
    sum_d = jnp.sum(parts[:, 0, 0])
    sum_o = jnp.sum(parts[:, 0, 1])
    sum_a = jnp.sum(parts[:, 0, 2])
    inv_n = 1.0 / float(N)
    return {
        'distance': regression_weight * sum_d * inv_n,
        'objectness': objectness_weight * sum_o * inv_n,
        'no_objectness': no_objectness_weight * (sum_a - sum_o) * inv_n,
    }


# -----------------------------------------------------------------------------
# Host-side glue: GT matching (Line objects / ragged per-column argmin)
# -----------------------------------------------------------------------------
def _endpoints(cx, cy, ang, ln):
    p0x = cx - ln * np.cos(ang) / 2.0
    p0y = cy - ln * np.sin(ang) / 2.0
    p1x = cx + ln * np.cos(ang) / 2.0
    p1y = cy + ln * np.sin(ang) / 2.0
    return p0x, p0y, p1x, p1y


def build_targets(pred_np, gt_batch, image_size, n_columns, anchors_per_column):
    """Dense replacement for the Line-object matching loops of the module.

    gt_batch: list (per image) of np arrays (num_lines, 4) = [cx, cy, angle, length]
    Returns best endpoint tensor (B,C,A,4), objectness targets (B,C,A,1),
    objects mask (B,C,A,1).  Vectorized over anchors/GT lines.
    """
    # TODO(synk): utils.get_distance_between_lines is an external dependency;
    # a symmetric endpoint Hausdorff distance is used as a stand-in here.
    B = pred_np.shape[0]
    A = anchors_per_column
    W, H = image_size

    cx = pred_np[..., 1] * W
    cy = pred_np[..., 2] * H
    ang = pred_np[..., 3] * np.pi
    ln = pred_np[..., 4] * W
    p0x, p0y, p1x, p1y = _endpoints(cx, cy, ang, ln)

    best = np.zeros((B, n_columns, A, 4), np.float32)
    objness = np.zeros((B, n_columns, A, 1), np.float32)
    mask = np.zeros((B, n_columns, A, 1), np.float32)

    for b in range(B):
        cols = [[] for _ in range(n_columns)]
        for g in gt_batch[b]:
            # get_lines_grouped_by_column uses image_size[0]
            x = int(g[0] * n_columns // W)
            x = min(x, n_columns - 1)
            cols[x].append(g)
            # faithful to the module: get_objectness_mask divides by image_size[1]
            xm = int(g[0] * n_columns // H)
            xm = min(xm, n_columns - 1)
            mask[b, xm, :, 0] = 1.0

        for c in range(n_columns):
            if len(cols[c]) == 0:
                # best_match = None -> best points stay 0, confidence(inf) = 0
                continue
            gts = np.stack(cols[c]).astype(np.float32)                 # (G, 4)
            gp0x, gp0y, gp1x, gp1y = _endpoints(gts[:, 0], gts[:, 1],
                                                gts[:, 2], gts[:, 3])  # (G,)
            ax0 = p0x[b, c, :][None, :]; ay0 = p0y[b, c, :][None, :]   # (1, A)
            ax1 = p1x[b, c, :][None, :]; ay1 = p1y[b, c, :][None, :]
            g0x = gp0x[:, None]; g0y = gp0y[:, None]                   # (G, 1)
            g1x = gp1x[:, None]; g1y = gp1y[:, None]
            d00 = np.hypot(ax0 - g0x, ay0 - g0y)                       # (G, A)
            d01 = np.hypot(ax0 - g1x, ay0 - g1y)
            d10 = np.hypot(ax1 - g0x, ay1 - g0y)
            d11 = np.hypot(ax1 - g1x, ay1 - g1y)
            dists = np.maximum.reduce([np.minimum(d00, d01),
                                       np.minimum(d10, d11),
                                       np.minimum(d00, d10),
                                       np.minimum(d01, d11)])          # (G, A)
            idx = np.argmin(dists, axis=0)                             # (A,)
            dmin = dists[idx, np.arange(A)]
            best[b, c, :, 0] = gp0x[idx]
            best[b, c, :, 1] = gp0y[idx]
            best[b, c, :, 2] = gp1x[idx]
            best[b, c, :, 3] = gp1y[idx]
            objness[b, c, :, 0] = np.where(dmin < 40.0, 1.0 - dmin / 40.0, 0.0)

    return best, objness, mask


# -----------------------------------------------------------------------------
# numpy reference of the dense part (for a correctness check)
# -----------------------------------------------------------------------------
def _reference_losses(pred_np, best, objness, mask, image_size,
                      w_obj, w_noobj, w_reg):
    W, H = image_size
    conf = pred_np[..., 0]
    cx = pred_np[..., 1] * W
    cy = pred_np[..., 2] * H
    ang = pred_np[..., 3] * np.pi
    ln = pred_np[..., 4] * W
    p0x, p0y, p1x, p1y = _endpoints(cx, cy, ang, ln)
    b0x = best[..., 0]; b0y = best[..., 1]
    b1x = best[..., 2]; b1y = best[..., 3]
    d00 = np.hypot(p0x - b0x, p0y - b0y)
    d01 = np.hypot(p0x - b1x, p0y - b1y)
    d10 = np.hypot(p1x - b0x, p1y - b0y)
    d11 = np.hypot(p1x - b1x, p1y - b1y)
    hd = np.maximum.reduce([np.minimum(d00, d01), np.minimum(d10, d11),
                            np.minimum(d00, d10), np.minimum(d01, d11)])
    m = mask[..., 0]
    o = objness[..., 0]
    diff = conf - o
    return {
        'distance': w_reg * np.mean(m * hd),
        'objectness': w_obj * np.mean((m * diff) ** 2),
        'no_objectness': w_noobj * np.mean(((1.0 - m) * diff) ** 2),
    }


# -----------------------------------------------------------------------------
if __name__ == "__main__":
    # module config (weights sum to 1.0, satisfying the module's assert)
    image_size = (16, 16)
    n_columns = 4
    anchors_per_column = 8
    objectness_weight = 0.4
    no_objectness_weight = 0.3
    regression_weight = 0.3
    batch = 2

    key = jax.random.PRNGKey(0)
    pred = jax.random.uniform(key, (batch, n_columns, anchors_per_column, 5),
                              dtype=jnp.float32)

    # deterministic synthetic GT: per-image arrays of [cx, cy, angle, length]
    gt_batch = [
        np.array([[3.0, 5.0, 0.3, 6.0],
                  [9.5, 8.0, 1.2, 5.0],
                  [14.0, 2.0, 2.0, 4.0]], dtype=np.float32),
        np.array([[1.5, 12.0, 0.8, 7.0],
                  [7.0, 3.0, 2.5, 3.0]], dtype=np.float32),
    ]

    pred_np = np.asarray(pred)
    best_pts, objectness, objects_mask = build_targets(
        pred_np, gt_batch, image_size, n_columns, anchors_per_column)

    common = dict(image_size=image_size,
                  objectness_weight=objectness_weight,
                  no_objectness_weight=no_objectness_weight,
                  regression_weight=regression_weight)

    best_j = jnp.asarray(best_pts)
    obj_j = jnp.asarray(objectness)
    mask_j = jnp.asarray(objects_mask)

    # --- default bf16 fast path ---
    losses_bf16 = hausdorff_loss_pallas(pred, best_j, obj_j, mask_j, **common)
    losses_bf16 = jax.tree_util.tree_map(jax.block_until_ready, losses_bf16)

    # reference computed from the same bf16-quantized inputs (apples-to-apples)
    def _q(x):
        return np.asarray(jnp.asarray(np.asarray(x), jnp.bfloat16).astype(jnp.float32))

    ref_bf16 = _reference_losses(_q(pred_np), _q(best_pts), _q(objectness),
                                 _q(objects_mask), image_size,
                                 objectness_weight, no_objectness_weight,
                                 regression_weight)

    # --- full-precision path (input_dtype=f32) ---
    losses_f32 = hausdorff_loss_pallas(pred, best_j, obj_j, mask_j,
                                       input_dtype=jnp.float32, **common)
    losses_f32 = jax.tree_util.tree_map(jax.block_until_ready, losses_f32)
    ref_f32 = _reference_losses(pred_np, best_pts, objectness, objects_mask,
                                image_size, objectness_weight,
                                no_objectness_weight, regression_weight)

    for k in ('distance', 'objectness', 'no_objectness'):
        vb = float(losses_bf16[k])
        vf = float(losses_f32[k])
        assert np.isfinite(vb) and np.isfinite(vf)
        np.testing.assert_allclose(vb, ref_bf16[k], rtol=1e-3, atol=1e-5)
        np.testing.assert_allclose(vf, ref_f32[k], rtol=1e-3, atol=1e-5)
    print("KERNEL_OK")
</pallas_src>

<mosaic_0001>
module attributes {stable_mosaic.version = 11 : i64} {
  func.func @_hausdorff_sums_kernel(%arg0: i32, %arg1: i32, %arg2: memref<11x16x128xbf16, #tpu.memory_space<vmem>>, %arg3: memref<8x128xf32, #tpu.memory_space<vmem>>, %arg4: memref<16x128xf32, #tpu.memory_space<vmem>>, %arg5: memref<16x128xf32, #tpu.memory_space<vmem>>, %arg6: memref<16x128xf32, #tpu.memory_space<vmem>>) attributes {dimension_semantics = [#tpu.dimension_semantics<parallel>, #tpu.dimension_semantics<arbitrary>], iteration_bounds = array<i64: 1, 1>, scalar_prefetch = 0 : i64, scratch_operands = 3 : i64, tpu.core_type = #tpu.core_type<tc>, window_params = [{transform_indices = @transform_0, window_bounds = array<i64: 11, 16, 128>}, {transform_indices = @transform_1, window_bounds = array<i64: 8, 128>}]} {
    %c0_i32 = arith.constant 0 : i32
    %0 = arith.cmpi eq, %arg1, %c0_i32 : i32
    %1 = arith.extui %0 : i1 to i32
    %c0_i32_0 = arith.constant 0 : i32
    %2 = arith.cmpi ne, %1, %c0_i32_0 : i32
    scf.if %2 {
      %cst_34 = arith.constant 0.000000e+00 : f32
      %115 = vector.broadcast %cst_34 : f32 to vector<16x128xf32>
      %c0_35 = arith.constant 0 : index
      %c0_36 = arith.constant 0 : index
      %116 = vector.load %arg4[%c0_35, %c0_36] : memref<16x128xf32, #tpu.memory_space<vmem>>, vector<16x128xf32>
      tpu.vector_store %arg4[%c0_35, %c0_36], %115 {strides = array<i32>} : memref<16x128xf32, #tpu.memory_space<vmem>>, vector<16x128xf32>,
      %cst_37 = arith.constant 0.000000e+00 : f32
      %117 = vector.broadcast %cst_37 : f32 to vector<16x128xf32>
      %c0_38 = arith.constant 0 : index
      %c0_39 = arith.constant 0 : index
      %118 = vector.load %arg5[%c0_38, %c0_39] : memref<16x128xf32, #tpu.memory_space<vmem>>, vector<16x128xf32>
      tpu.vector_store %arg5[%c0_38, %c0_39], %117 {strides = array<i32>} : memref<16x128xf32, #tpu.memory_space<vmem>>, vector<16x128xf32>,
      %cst_40 = arith.constant 0.000000e+00 : f32
      %119 = vector.broadcast %cst_40 : f32 to vector<16x128xf32>
      %c0_41 = arith.constant 0 : index
      %c0_42 = arith.constant 0 : index
      %120 = vector.load %arg6[%c0_41, %c0_42] : memref<16x128xf32, #tpu.memory_space<vmem>>, vector<16x128xf32>
      tpu.vector_store %arg6[%c0_41, %c0_42], %119 {strides = array<i32>} : memref<16x128xf32, #tpu.memory_space<vmem>>, vector<16x128xf32>,
    } else {
    }
    %c0_i32_1 = arith.constant 0 : i32
    %c1_i32 = arith.constant 1 : i32
    %3 = arith.muli %c0_i32_1, %c1_i32 : i32
    %c0_i32_2 = arith.constant 0 : i32
    %4 = arith.addi %c0_i32_2, %3 : i32
    %c16_i32 = arith.constant 16 : i32
    %5 = arith.muli %4, %c16_i32 : i32
    %6 = tpu.assume_multiple %5, 16 : i32
    %c0 = arith.constant 0 : index
    %7 = arith.index_cast %6 : i32 to index
    %c0_3 = arith.constant 0 : index
    %8 = vector.load %arg2[%c0, %7, %c0_3] : memref<11x16x128xbf16, #tpu.memory_space<vmem>>, vector<1x16x128xbf16>
    %9 = vector.shape_cast %8 : vector<1x16x128xbf16> to vector<16x128xbf16>
    %10 = arith.extf %9 : vector<16x128xbf16> to vector<16x128xf32>
    %c1 = arith.constant 1 : index
    %11 = arith.index_cast %6 : i32 to index
    %c0_4 = arith.constant 0 : index
    %12 = vector.load %arg2[%c1, %11, %c0_4] : memref<11x16x128xbf16, #tpu.memory_space<vmem>>, vector<1x16x128xbf16>
    %13 = vector.shape_cast %12 : vector<1x16x128xbf16> to vector<16x128xbf16>
    %14 = arith.extf %13 : vector<16x128xbf16> to vector<16x128xf32>
    %cst = arith.constant 1.600000e+01 : f32
    %15 = vector.broadcast %cst : f32 to vector<16x128xf32>
    %16 = arith.mulf %14, %15 : vector<16x128xf32>
    %c2 = arith.constant 2 : index
    %17 = arith.index_cast %6 : i32 to index
    %c0_5 = arith.constant 0 : index
    %18 = vector.load %arg2[%c2, %17, %c0_5] : memref<11x16x128xbf16, #tpu.memory_space<vmem>>, vector<1x16x128xbf16>
    %19 = vector.shape_cast %18 : vector<1x16x128xbf16> to vector<16x128xbf16>
    %20 = arith.extf %19 : vector<16x128xbf16> to vector<16x128xf32>
    %cst_6 = arith.constant 1.600000e+01 : f32
    %21 = vector.broadcast %cst_6 : f32 to vector<16x128xf32>
    %22 = arith.mulf %20, %21 : vector<16x128xf32>
    %c3 = arith.constant 3 : index
    %23 = arith.index_cast %6 : i32 to index
    %c0_7 = arith.constant 0 : index
    %24 = vector.load %arg2[%c3, %23, %c0_7] : memref<11x16x128xbf16, #tpu.memory_space<vmem>>, vector<1x16x128xbf16>
    %25 = vector.shape_cast %24 : vector<1x16x128xbf16> to vector<16x128xbf16>
    %26 = arith.extf %25 : vector<16x128xbf16> to vector<16x128xf32>
    %cst_8 = arith.constant 3.14159274 : f32
    %27 = vector.broadcast %cst_8 : f32 to vector<16x128xf32>
    %28 = arith.mulf %26, %27 : vector<16x128xf32>
    %c4 = arith.constant 4 : index
    %29 = arith.index_cast %6 : i32 to index
    %c0_9 = arith.constant 0 : index
    %30 = vector.load %arg2[%c4, %29, %c0_9] : memref<11x16x128xbf16, #tpu.memory_space<vmem>>, vector<1x16x128xbf16>
    %31 = vector.shape_cast %30 : vector<1x16x128xbf16> to vector<16x128xbf16>
    %32 = arith.extf %31 : vector<16x128xbf16> to vector<16x128xf32>
    %cst_10 = arith.constant 1.600000e+01 : f32
    %33 = vector.broadcast %cst_10 : f32 to vector<16x128xf32>
    %34 = arith.mulf %32, %33 : vector<16x128xf32>
    %c5 = arith.constant 5 : index
    %35 = arith.index_cast %6 : i32 to index
    %c0_11 = arith.constant 0 : index
    %36 = vector.load %arg2[%c5, %35, %c0_11] : memref<11x16x128xbf16, #tpu.memory_space<vmem>>, vector<1x16x128xbf16>
    %37 = vector.shape_cast %36 : vector<1x16x128xbf16> to vector<16x128xbf16>
    %38 = arith.extf %37 : vector<16x128xbf16> to vector<16x128xf32>
    %c6 = arith.constant 6 : index
    %39 = arith.index_cast %6 : i32 to index
    %c0_12 = arith.constant 0 : index
    %40 = vector.load %arg2[%c6, %39, %c0_12] : memref<11x16x128xbf16, #tpu.memory_space<vmem>>, vector<1x16x128xbf16>
    %41 = vector.shape_cast %40 : vector<1x16x128xbf16> to vector<16x128xbf16>
    %42 = arith.extf %41 : vector<16x128xbf16> to vector<16x128xf32>
    %c7 = arith.constant 7 : index
    %43 = arith.index_cast %6 : i32 to index
    %c0_13 = arith.constant 0 : index
    %44 = vector.load %arg2[%c7, %43, %c0_13] : memref<11x16x128xbf16, #tpu.memory_space<vmem>>, vector<1x16x128xbf16>
    %45 = vector.shape_cast %44 : vector<1x16x128xbf16> to vector<16x128xbf16>
    %46 = arith.extf %45 : vector<16x128xbf16> to vector<16x128xf32>
    %c8 = arith.constant 8 : index
    %47 = arith.index_cast %6 : i32 to index
    %c0_14 = arith.constant 0 : index
    %48 = vector.load %arg2[%c8, %47, %c0_14] : memref<11x16x128xbf16, #tpu.memory_space<vmem>>, vector<1x16x128xbf16>
    %49 = vector.shape_cast %48 : vector<1x16x128xbf16> to vector<16x128xbf16>
    %50 = arith.extf %49 : vector<16x128xbf16> to vector<16x128xf32>
    %c9 = arith.constant 9 : index
    %51 = arith.index_cast %6 : i32 to index
    %c0_15 = arith.constant 0 : index
    %52 = vector.load %arg2[%c9, %51, %c0_15] : memref<11x16x128xbf16, #tpu.memory_space<vmem>>, vector<1x16x128xbf16>
    %53 = vector.shape_cast %52 : vector<1x16x128xbf16> to vector<16x128xbf16>
    %54 = arith.extf %53 : vector<16x128xbf16> to vector<16x128xf32>
    %c10 = arith.constant 10 : index
    %55 = arith.index_cast %6 : i32 to index
    %c0_16 = arith.constant 0 : index
    %56 = vector.load %arg2[%c10, %55, %c0_16] : memref<11x16x128xbf16, #tpu.memory_space<vmem>>, vector<1x16x128xbf16>
    %57 = vector.shape_cast %56 : vector<1x16x128xbf16> to vector<16x128xbf16>
    %58 = arith.extf %57 : vector<16x128xbf16> to vector<16x128xf32>
    %59 = math.cos %28 : vector<16x128xf32>
    %60 = arith.mulf %34, %59 : vector<16x128xf32>
    %cst_17 = arith.constant 5.000000e-01 : f32
    %61 = vector.broadcast %cst_17 : f32 to vector<16x128xf32>
    %62 = arith.mulf %60, %61 : vector<16x128xf32>
    %63 = math.sin %28 : vector<16x128xf32>
    %64 = arith.mulf %34, %63 : vector<16x128xf32>
    %cst_18 = arith.constant 5.000000e-01 : f32
    %65 = vector.broadcast %cst_18 : f32 to vector<16x128xf32>
    %66 = arith.mulf %64, %65 : vector<16x128xf32>
    %67 = arith.subf %16, %62 : vector<16x128xf32>
    %68 = arith.subf %22, %66 : vector<16x128xf32>
    %69 = arith.addf %16, %62 : vector<16x128xf32>
    %70 = arith.addf %22, %66 : vector<16x128xf32>
    %71 = arith.subf %67, %38 : vector<16x128xf32>
    %72 = arith.subf %68, %42 : vector<16x128xf32>
    %73 = arith.mulf %71, %71 : vector<16x128xf32>
    %74 = arith.mulf %72, %72 : vector<16x128xf32>
    %75 = arith.addf %73, %74 : vector<16x128xf32>
    %76 = arith.subf %67, %46 : vector<16x128xf32>
    %77 = arith.subf %68, %50 : vector<16x128xf32>
    %78 = arith.mulf %76, %76 : vector<16x128xf32>
    %79 = arith.mulf %77, %77 : vector<16x128xf32>
    %80 = arith.addf %78, %79 : vector<16x128xf32>
    %81 = arith.subf %69, %38 : vector<16x128xf32>
    %82 = arith.subf %70, %42 : vector<16x128xf32>
    %83 = arith.mulf %81, %81 : vector<16x128xf32>
    %84 = arith.mulf %82, %82 : vector<16x128xf32>
    %85 = arith.addf %83, %84 : vector<16x128xf32>
    %86 = arith.subf %69, %46 : vector<16x128xf32>
    %87 = arith.subf %70, %50 : vector<16x128xf32>
    %88 = arith.mulf %86, %86 : vector<16x128xf32>
    %89 = arith.mulf %87, %87 : vector<16x128xf32>
    %90 = arith.addf %88, %89 : vector<16x128xf32>
    %91 = arith.minimumf %75, %80 : vector<16x128xf32>
    %92 = arith.minimumf %85, %90 : vector<16x128xf32>
    %93 = arith.maximumf %91, %92 : vector<16x128xf32>
    %94 = arith.minimumf %75, %85 : vector<16x128xf32>
    %95 = arith.minimumf %80, %90 : vector<16x128xf32>
    %96 = arith.maximumf %94, %95 : vector<16x128xf32>
    %97 = arith.maximumf %93, %96 : vector<16x128xf32>
    %c0_19 = arith.constant 0 : index
    %c0_20 = arith.constant 0 : index
    %98 = vector.load %arg4[%c0_19, %c0_20] : memref<16x128xf32, #tpu.memory_space<vmem>>, vector<16x128xf32>
    %99 = math.sqrt %97 : vector<16x128xf32>
    %100 = arith.mulf %58, %99 : vector<16x128xf32>
    %101 = arith.addf %98, %100 : vector<16x128xf32>
    %c0_21 = arith.constant 0 : index
    %c0_22 = arith.constant 0 : index
    %102 = vector.load %arg4[%c0_21, %c0_22] : memref<16x128xf32, #tpu.memory_space<vmem>>, vector<16x128xf32>
    tpu.vector_store %arg4[%c0_21, %c0_22], %101 {strides = array<i32>} : memref<16x128xf32, #tpu.memory_space<vmem>>, vector<16x128xf32>,
    %103 = arith.subf %10, %54 : vector<16x128xf32>
    %104 = arith.mulf %103, %103 : vector<16x128xf32>
    %c0_23 = arith.constant 0 : index
    %c0_24 = arith.constant 0 : index
    %105 = vector.load %arg6[%c0_23, %c0_24] : memref<16x128xf32, #tpu.memory_space<vmem>>, vector<16x128xf32>
    %106 = arith.addf %105, %104 : vector<16x128xf32>
    %c0_25 = arith.constant 0 : index
    %c0_26 = arith.constant 0 : index
    %107 = vector.load %arg6[%c0_25, %c0_26] : memref<16x128xf32, #tpu.memory_space<vmem>>, vector<16x128xf32>
    tpu.vector_store %arg6[%c0_25, %c0_26], %106 {strides = array<i32>} : memref<16x128xf32, #tpu.memory_space<vmem>>, vector<16x128xf32>,
    %c0_27 = arith.constant 0 : index
    %c0_28 = arith.constant 0 : index
    %108 = vector.load %arg5[%c0_27, %c0_28] : memref<16x128xf32, #tpu.memory_space<vmem>>, vector<16x128xf32>
    %109 = arith.mulf %58, %104 : vector<16x128xf32>
    %110 = arith.addf %108, %109 : vector<16x128xf32>
    %c0_29 = arith.constant 0 : index
    %c0_30 = arith.constant 0 : index
    %111 = vector.load %arg5[%c0_29, %c0_30] : memref<16x128xf32, #tpu.memory_space<vmem>>, vector<16x128xf32>
    tpu.vector_store %arg5[%c0_29, %c0_30], %110 {strides = array<i32>} : memref<16x128xf32, #tpu.memory_space<vmem>>, vector<16x128xf32>,
    %c1_i32_31 = arith.constant 1 : i32
    %c0_i32_32 = arith.constant 0 : i32
    %112 = arith.cmpi eq, %arg1, %c0_i32_32 : i32
    %113 = arith.extui %112 : i1 to i32
    %c0_i32_33 = arith.constant 0 : i32
    %114 = arith.cmpi ne, %113, %c0_i32_33 : i32
    scf.if %114 {
      %c0_34 = arith.constant 0 : index
      %c0_35 = arith.constant 0 : index
      %115 = vector.load %arg4[%c0_34, %c0_35] : memref<16x128xf32, #tpu.memory_space<vmem>>, vector<16x128xf32>
      %116 = vector.shape_cast %115 : vector<16x128xf32> to vector<1x16x128xf32>
      %cst_36 = arith.constant dense<0.000000e+00> : vector<1xf32>
      %117 = vector.multi_reduction <add>, %116, %cst_36 [1, 2] : vector<1x16x128xf32> to vector<1xf32>
      %118 = vector.shape_cast %117 : vector<1xf32> to vector<1x1x1xf32>
      %119 = vector.extract %118[0, 0, 0] : f32 from vector<1x1x1xf32>
      %c0_37 = arith.constant 0 : index
      %c0_38 = arith.constant 0 : index
      %120 = vector.load %arg5[%c0_37, %c0_38] : memref<16x128xf32, #tpu.memory_space<vmem>>, vector<16x128xf32>
      %121 = vector.shape_cast %120 : vector<16x128xf32> to vector<1x16x128xf32>
      %cst_39 = arith.constant dense<0.000000e+00> : vector<1xf32>
      %122 = vector.multi_reduction <add>, %121, %cst_39 [1, 2] : vector<1x16x128xf32> to vector<1xf32>
      %123 = vector.shape_cast %122 : vector<1xf32> to vector<1x1x1xf32>
      %124 = vector.extract %123[0, 0, 0] : f32 from vector<1x1x1xf32>
      %c0_40 = arith.constant 0 : index
      %c0_41 = arith.constant 0 : index
      %125 = vector.load %arg6[%c0_40, %c0_41] : memref<16x128xf32, #tpu.memory_space<vmem>>, vector<16x128xf32>
      %126 = vector.shape_cast %125 : vector<16x128xf32> to vector<1x16x128xf32>
      %cst_42 = arith.constant dense<0.000000e+00> : vector<1xf32>
      %127 = vector.multi_reduction <add>, %126, %cst_42 [1, 2] : vector<1x16x128xf32> to vector<1xf32>
      %128 = vector.shape_cast %127 : vector<1xf32> to vector<1x1x1xf32>
      %129 = vector.extract %128[0, 0, 0] : f32 from vector<1x1x1xf32>
      %130 = tpu.iota {dimensions = array<i32: 0>} : vector<8x128xi32>
      %131 = tpu.iota {dimensions = array<i32: 1>} : vector<8x128xi32>
      %c0_i32_43 = arith.constant 0 : i32
      %132 = vector.broadcast %c0_i32_43 : i32 to vector<8x128xi32>
      %133 = arith.cmpi eq, %130, %132 : vector<8x128xi32>
      %c0_i32_44 = arith.constant 0 : i32
      %134 = vector.broadcast %c0_i32_44 : i32 to vector<8x128xi32>
      %135 = arith.cmpi eq, %131, %134 : vector<8x128xi32>
      %136 = arith.andi %133, %135 : vector<8x128xi1>
      %c0_i32_45 = arith.constant 0 : i32
      %137 = vector.broadcast %c0_i32_45 : i32 to vector<8x128xi32>
      %138 = arith.cmpi eq, %130, %137 : vector<8x128xi32>
      %c1_i32_46 = arith.constant 1 : i32
      %139 = vector.broadcast %c1_i32_46 : i32 to vector<8x128xi32>
      %140 = arith.cmpi eq, %131, %139 : vector<8x128xi32>
      %141 = arith.andi %138, %140 : vector<8x128xi1>
      %c0_i32_47 = arith.constant 0 : i32
      %142 = vector.broadcast %c0_i32_47 : i32 to vector<8x128xi32>
      %143 = arith.cmpi eq, %130, %142 : vector<8x128xi32>
      %c2_i32 = arith.constant 2 : i32
      %144 = vector.broadcast %c2_i32 : i32 to vector<8x128xi32>
      %145 = arith.cmpi eq, %131, %144 : vector<8x128xi32>
      %146 = arith.andi %143, %145 : vector<8x128xi1>
      %cst_48 = arith.constant 0.000000e+00 : f32
      %147 = vector.broadcast %129 : f32 to vector<8x128xf32>
      %148 = vector.broadcast %cst_48 : f32 to vector<8x128xf32>
      %149 = arith.select %146, %147, %148 : vector<8x128xi1>, vector<8x128xf32>
      %150 = vector.broadcast %124 : f32 to vector<8x128xf32>
      %151 = arith.select %141, %150, %149 : vector<8x128xi1>, vector<8x128xf32>
      %152 = vector.broadcast %119 : f32 to vector<8x128xf32>
      %153 = arith.select %136, %152, %151 : vector<8x128xi1>, vector<8x128xf32>
      %c0_49 = arith.constant 0 : index
      %c0_50 = arith.constant 0 : index
      %154 = vector.load %arg3[%c0_49, %c0_50] : memref<8x128xf32, #tpu.memory_space<vmem>>, vector<8x128xf32>
      tpu.vector_store %arg3[%c0_49, %c0_50], %153 {strides = array<i32>} : memref<8x128xf32, #tpu.memory_space<vmem>>, vector<8x128xf32>,
    } else {
    }
    return
  }
  func.func @transform_0(%arg0: i32, %arg1: i32) -> (i32, i32, i32) {
    %c1_i32 = arith.constant 1 : i32
    %0 = arith.muli %arg0, %c1_i32 : i32
    %1 = arith.addi %0, %arg1 : i32
    %c0_i32 = arith.constant 0 : i32
    %c0_i32_0 = arith.constant 0 : i32
    %c0_i32_1 = arith.constant 0 : i32
    return %c0_i32, %1, %c0_i32_0 : i32, i32, i32
  }
  func.func @transform_1(%arg0: i32, %arg1: i32) -> (i32, i32) {
    %c0_i32 = arith.constant 0 : i32
    %c0_i32_0 = arith.constant 0 : i32
    return %arg0, %c0_i32 : i32, i32
  }
}

</mosaic_0001>

<llo_original>
// kernel: tpu_custom_call.1
$region0: #{tpu_custom_call.1}
  #allocation0 [shape = 'u32[]', space=smem, size = 0x4, offset = 0x4, fixed_abs, tag = 'smem constant byte address 0x4 - core index']
  #allocation1 [shape = 'u32[144,128]{1,0:T(1,128)}', space=vmem, size = 0x12000, scoped, tag = 'internal scratch']
  #allocation2 [shape = 'f32[16,128]{1,0:T(8,128)}', space=vmem, size = 0x2000, scoped, tag = 'scratch operand']
  #allocation3 [shape = 'f32[16,128]{1,0:T(8,128)}', space=vmem, size = 0x2000, scoped, tag = 'scratch operand']
  #allocation4 [shape = 'f32[16,128]{1,0:T(8,128)}', space=vmem, size = 0x2000, scoped, tag = 'scratch operand']
  %s0 = inlined_call_operand.hbm [shape: bf16[11,16,128], index: 0, kind: input, shape index: {}]
  %s1 = inlined_call_operand.hbm [shape: f32[8,128], index: 1, kind: output, shape index: {}]
  %s2 = sld [smem:[#allocation0]]
  $region26: #{tpu_custom_call.1} parent=0
    _
  %s4 = ssub.s32 1, %s2
  %s5 = scalar_select 0, %s4, %s2
  $region1: #{tpu_custom_call.1} parent=0
    #allocation5 [shape = 'u8[45056]{0}', space=vmem, size = 0xb000, scoped, tag = 'input window, operand 0, single buffered']
    #allocation6 [shape = 's32[1]{0}', space=sflag, size = 0x4, scoped, tag = 'scoped memory for tpu_custom_call.1']
    #allocation7 [shape = 's32[1]{0}', space=sflag, size = 0x4, scoped, tag = 'scoped memory for tpu_custom_call.1']
    #allocation8 [shape = 'u8[4096]{0}', space=vmem, size = 0x1000, scoped, tag = 'output window, operand 0, single buffered']
    %6 = vsyncpa [#allocation6], 0
    %7 = vsyncpa [#allocation7], 0
    // Predicated region
    $region2: #{tpu_custom_call.1} parent=1 // pred_check
      _
    $region3: #{tpu_custom_call.1} parent=1 // pred_check_branch
      %9 = sbr.rel (0) target = $region5
    $region4: #{tpu_custom_call.1} parent=1 // pred_region
      %s10 = sadd.s32 0, 0
      %s11 = smul.u32 2, %s10
      %s13 = ssub.s32 1408, 1408
      %14 = vsyncadd [#allocation6], %s13
      %s15 = smul.addr %s11, 64
      %s16 = scalar_lea.hbm %s0, %s15
      %s17 = sshll.u32 [#allocation5], 4
      %s18 = int_to_ptr.vmem [resolvable:$true] %s17
      %23 = dma.hbm_to_vmem [thread:$0]  %s16, 1408, %s18, [#allocation6], 64, 64, 4
    $region5: #{tpu_custom_call.1} parent=1 // pred_fallthru
      _
    // Predicated region
    $region6: #{tpu_custom_call.1} parent=1 // pred_check
      _
    $region7: #{tpu_custom_call.1} parent=1 // pred_check_branch
      %25 = sbr.rel (0) target = $region9
    $region8: #{tpu_custom_call.1} parent=1 // pred_region
      %26 = dma.done [#allocation6], 1408
    $region9: #{tpu_custom_call.1} parent=1 // pred_fallthru
      _
    %s27 = sadd.s32 0, 0
    %s28 = smul.u32 2, %s27
    %p29 = scmp.eq.s32.totalorder 0, 0
    // Predicated region
    $region10: #{tpu_custom_call.1} parent=1 // pred_check
      %p30 = pneg %p29
    $region11: #{tpu_custom_call.1} parent=1 // pred_check_branch
      %32 = sbr.rel (%p30) target = $region13
    $region12: #{tpu_custom_call.1} parent=1 // pred_region
      %33 = vst [vmem:[#allocation2] sm:$0xff] 0.0
      %34 = vst [vmem:[#allocation2 + $0x8] sm:$0xff] 0.0
      %35 = vst [vmem:[#allocation3] sm:$0xff] 0.0
      %36 = vst [vmem:[#allocation3 + $0x8] sm:$0xff] 0.0
      %37 = vst [vmem:[#allocation4] sm:$0xff] 0.0
      %38 = vst [vmem:[#allocation4 + $0x8] sm:$0xff] 0.0
    $region13: #{tpu_custom_call.1} parent=1 // pred_fallthru
      _
    %v39 = vld [vmem:[#allocation5] sm:$0xf]
    %v40 = vld [vmem:[#allocation5 + $0x4] sm:$0xf]
    %v41 = vunpack.c.l.bf16 %v39
    %v42 = vunpack.c.l.bf16 %v40
    %s43 = sadd.s32 0, 2
    %s44 = smul.addr %s43, 4
    %s45 = scalar_lea.vmem [#allocation5], %s44
    %v46 = vld [vmem:[%s45] sm:$0xf]
    %v47 = vld [vmem:[%s45 + $0x4] sm:$0xf]
    %v48 = vunpack.c.l.bf16 %v46
    %v49 = vunpack.c.l.bf16 %v47
    %v50 = vmul.f32 %v48, 16.0
    %v51 = vmul.f32 %v49, 16.0
    %s52 = sadd.s32 0, 4
    %s53 = smul.addr %s52, 4
    %s54 = scalar_lea.vmem [#allocation5], %s53
    %v55 = vld [vmem:[%s54] sm:$0xf]
    %v56 = vld [vmem:[%s54 + $0x4] sm:$0xf]
    %v57 = vunpack.c.l.bf16 %v55
    %v58 = vunpack.c.l.bf16 %v56
    %v59 = vmul.f32 %v57, 16.0
    %v60 = vmul.f32 %v58, 16.0
    %s61 = sadd.s32 0, 6
    %s62 = smul.addr %s61, 4
    %s63 = scalar_lea.vmem [#allocation5], %s62
    %v64 = vld [vmem:[%s63] sm:$0xf]
    %v65 = vld [vmem:[%s63 + $0x4] sm:$0xf]
    %v66 = vunpack.c.l.bf16 %v64
    %v67 = vunpack.c.l.bf16 %v65
    %v68 = vmul.f32 %v66, 3.1415927
    %v69 = vmul.f32 %v67, 3.1415927
    %s70 = sadd.s32 0, 8
    %s71 = smul.addr %s70, 4
    %s72 = scalar_lea.vmem [#allocation5], %s71
    %v73 = vld [vmem:[%s72] sm:$0xf]
    %v74 = vld [vmem:[%s72 + $0x4] sm:$0xf]
    %v75 = vunpack.c.l.bf16 %v73
    %v76 = vunpack.c.l.bf16 %v74
    %v77 = vmul.f32 %v75, 16.0
    %v78 = vmul.f32 %v76, 16.0
    %s79 = sadd.s32 0, 10
    %s80 = smul.addr %s79, 4
    %s81 = scalar_lea.vmem [#allocation5], %s80
    %v82 = vld [vmem:[%s81] sm:$0xf]
    %v83 = vld [vmem:[%s81 + $0x4] sm:$0xf]
    %v84 = vunpack.c.l.bf16 %v82
    %v85 = vunpack.c.l.bf16 %v83
    %s86 = sadd.s32 0, 12
    %s87 = smul.addr %s86, 4
    %s88 = scalar_lea.vmem [#allocation5], %s87
    %v89 = vld [vmem:[%s88] sm:$0xf]
    %v90 = vld [vmem:[%s88 + $0x4] sm:$0xf]
    %v91 = vunpack.c.l.bf16 %v89
    %v92 = vunpack.c.l.bf16 %v90
    %s93 = sadd.s32 0, 14
    %s94 = smul.addr %s93, 4
    %s95 = scalar_lea.vmem [#allocation5], %s94
    %v96 = vld [vmem:[%s95] sm:$0xf]
    %v97 = vld [vmem:[%s95 + $0x4] sm:$0xf]
    %v98 = vunpack.c.l.bf16 %v96
    %v99 = vunpack.c.l.bf16 %v97
    %s100 = sadd.s32 0, 16
    %s101 = smul.addr %s100, 4
    %s102 = scalar_lea.vmem [#allocation5], %s101
    %v103 = vld [vmem:[%s102] sm:$0xf]
    %v104 = vld [vmem:[%s102 + $0x4] sm:$0xf]
    %v105 = vunpack.c.l.bf16 %v103
    %v106 = vunpack.c.l.bf16 %v104
    %s107 = sadd.s32 0, 18
    %s108 = smul.addr %s107, 4
    %s109 = scalar_lea.vmem [#allocation5], %s108
    %v110 = vld [vmem:[%s109] sm:$0xf]
    %v111 = vld [vmem:[%s109 + $0x4] sm:$0xf]
    %v112 = vunpack.c.l.bf16 %v110
    %v113 = vunpack.c.l.bf16 %v111
    %s114 = sadd.s32 0, 20
    %s115 = smul.addr %s114, 4
    %s116 = scalar_lea.vmem [#allocation5], %s115
    %v117 = vld [vmem:[%s116] sm:$0xf]
    %v118 = vld [vmem:[%s116 + $0x4] sm:$0xf]
    %v119 = vunpack.c.l.bf16 %v117
    %v120 = vunpack.c.l.bf16 %v118
    %v121 = vand.u32 2147483647, %v68
    %vm122 = vcmp.le.f32.partialorder %v121, 0.7853982
    %vm123 = vcmp.lt.s32.totalorder %v68, 0
    %v124 = vand.u32 %v68, 2139095040
    %v125 = vshrl.u32 %v124, 23
    %v126 = vsub.s32 %v125, 127
    %v127 = vand.u32 2147483647, %v68
    %v128 = vand.u32 %v127, 8388607
    %v129 = vor.u32 %v128, 8388608
    %v130 = vsub.s32 0, %v129
    %v131 = vadd.s32 %v126, 1
    %vm132 = vcmp.gt.s32.totalorder %v131, 0
    %v133 = vsel %vm132, %v131, 0
    %v134 = vshrl.u32 %v133, 5
    %v135 = vand.u32 %v133, 31
    %v136 = vsub.s32 32, %v135
    %v137 = vshrl.u32 683565275, %v136
    %v138 = vshll.u32 683565275, %v135
    %v139 = vshrl.u32 2475754826, %v136
    %v140 = vor.u32 %v138, %v139
    %v141 = vshll.u32 2475754826, %v135
    %v142 = vshrl.u32 2131351028, %v136
    %v143 = vor.u32 %v141, %v142
    %v144 = vshll.u32 2131351028, %v135
    %v145 = vshrl.u32 2102212464, %v136
    %v146 = vor.u32 %v144, %v145
    %v147 = vshll.u32 2102212464, %v135
    %v148 = vshrl.u32 920167782, %v136
    %v149 = vor.u32 %v147, %v148
    %v150 = vshll.u32 920167782, %v135
    %v151 = vshrl.u32 1326507024, %v136
    %v152 = vor.u32 %v150, %v151
    %vm153 = vcmp.lt.s32.totalorder %v134, 1
    %vm154 = vcmp.lt.s32.totalorder %v134, 2
    %vm155 = vcmp.lt.s32.totalorder %v134, 3
    %vm156 = vcmp.lt.s32.totalorder %v134, 4
    %v157 = vsel %vm153, %v137, %v140
    %v158 = vsel %vm156, %v146, 2102212464
    %v159 = vsel %vm155, %v143, %v158
    %v160 = vsel %vm154, %v157, %v159
    %v161 = vsel %vm153, %v140, %v143
    %v162 = vsel %vm156, %v149, 920167782
    %v163 = vsel %vm155, %v146, %v162
    %v164 = vsel %vm154, %v161, %v163
    %v165 = vsel %vm153, %v143, %v146
    %v166 = vsel %vm156, %v152, 1326507024
    %v167 = vsel %vm155, %v149, %v166
    %v168 = vsel %vm154, %v165, %v167
    %v169 = vshll.u32 %v129, 8
    %v170 = vmul.u32.u64.compose %v169, %v168
    %v171 = vextract.low.u32 %v170
    %v172 = vextract.high.u32 %v170
    %v173 = vmul.u32.u64.compose %v169, %v164
    %v174 = vextract.low.u32 %v173
    %v175 = vextract.high.u32 %v173
    %v176 = vmul.u32 %v169, %v160
    %v177 = vadd.s32 %v172, %v174
    %vm178 = vc.u32 %v172, %v174
    %v179 = vadd.s32 %v175, 1
    %v180 = vsel %vm178, %v179, %v175
    %v181 = vadd.s32 %v176, %v180
    %v182 = vadd.s32 %v181, 536870912
    %v183 = vshrl.u32 %v182, 30
    %v184 = vshll.u32 %v183, 30
    %v185 = vsub.s32 %v181, %v184
    %vm186 = vcmp.lt.s32.totalorder %v185, 0
    %v187 = vsub.s32 0, %v185
    %v188 = vsel %vm186, %v187, %v185
    %v189 = vclz %v188
    %v190 = vsub.s32 %v189, 2
    %vm191 = vcmp.gt.s32.totalorder 0, %v190
    %v192 = vsel %vm191, 0, %v190
    %v193 = vsub.s32 32, %v192
    %v194 = vshll.u32 %v185, %v192
    %v195 = vshrl.u32 %v177, %v193
    %v196 = vor.u32 %v194, %v195
    %v197 = vsub.s32 4294967266, %v192
    %v198 = vadd.s32 %v197, 127
    %v199 = vshll.u32 %v198, 23
    %v200 = vor.u32 4788187, %v199
    %v201 = vand.u32 2147483647, %v200
    %v203 = vcvt.s32.f32 %v196
    %v204 = vmul.f32 %v203, %v201
    %v205 = vxor.u32 %v204, 2147483648
    %v206 = vsel %vm123, %v205, %v204
    %v207 = vsub.s32 4, %v183
    %v208 = vsel %vm123, %v207, %v183
    %v209 = vsel %vm122, %v68, %v206
    %v210 = vsel %vm122, 0, %v208
    %v211 = vcosq.f32.pop %v209
    %v212 = vsinq.f32.pop %v209
    %vm213 = vweird.f32 %v68
    %v214 = vand.u32 %v210, 3
    %vm215 = vcmp.lt.s32.totalorder %v214, 2
    %vm216 = vcmp.eq.s32.totalorder %v214, 0
    %v217 = vxor.u32 %v212, 2147483648
    %v218 = vsel %vm216, %v211, %v217
    %vm219 = vcmp.eq.s32.totalorder %v214, 2
    %v220 = vxor.u32 %v211, 2147483648
    %v221 = vsel %vm219, %v220, %v212
    %v222 = vsel %vm215, %v218, %v221
    %v223 = vsel %vm213, nan, %v222
    %v224 = vand.u32 2147483647, %v69
    %vm225 = vcmp.le.f32.partialorder %v224, 0.7853982
    %vm226 = vcmp.lt.s32.totalorder %v69, 0
    %v227 = vand.u32 %v69, 2139095040
    %v228 = vshrl.u32 %v227, 23
    %v229 = vsub.s32 %v228, 127
    %v230 = vand.u32 2147483647, %v69
    %v231 = vand.u32 %v230, 8388607
    %v232 = vor.u32 %v231, 8388608
    %v233 = vsub.s32 0, %v232
    %v234 = vadd.s32 %v229, 1
    %vm235 = vcmp.gt.s32.totalorder %v234, 0
    %v236 = vsel %vm235, %v234, 0
    %v237 = vshrl.u32 %v236, 5
    %v238 = vand.u32 %v236, 31
    %v239 = vsub.s32 32, %v238
    %v240 = vshrl.u32 683565275, %v239
    %v241 = vshll.u32 683565275, %v238
    %v242 = vshrl.u32 2475754826, %v239
    %v243 = vor.u32 %v241, %v242
    %v244 = vshll.u32 2475754826, %v238
    %v245 = vshrl.u32 2131351028, %v239
    %v246 = vor.u32 %v244, %v245
    %v247 = vshll.u32 2131351028, %v238
    %v248 = vshrl.u32 2102212464, %v239
    %v249 = vor.u32 %v247, %v248
    %v250 = vshll.u32 2102212464, %v238
    %v251 = vshrl.u32 920167782, %v239
    %v252 = vor.u32 %v250, %v251
    %v253 = vshll.u32 920167782, %v238
    %v254 = vshrl.u32 1326507024, %v239
    %v255 = vor.u32 %v253, %v254
    %vm256 = vcmp.lt.s32.totalorder %v237, 1
    %vm257 = vcmp.lt.s32.totalorder %v237, 2
    %vm258 = vcmp.lt.s32.totalorder %v237, 3
    %vm259 = vcmp.lt.s32.totalorder %v237, 4
    %v260 = vsel %vm256, %v240, %v243
    %v261 = vsel %vm259, %v249, 2102212464
    %v262 = vsel %vm258, %v246, %v261
    %v263 = vsel %vm257, %v260, %v262
    %v264 = vsel %vm256, %v243, %v246
    %v265 = vsel %vm259, %v252, 920167782
    %v266 = vsel %vm258, %v249, %v265
    %v267 = vsel %vm257, %v264, %v266
    %v268 = vsel %vm256, %v246, %v249
    %v269 = vsel %vm259, %v255, 1326507024
    %v270 = vsel %vm258, %v252, %v269
    %v271 = vsel %vm257, %v268, %v270
    %v272 = vshll.u32 %v232, 8
    %v273 = vmul.u32.u64.compose %v272, %v271
    %v274 = vextract.low.u32 %v273
    %v275 = vextract.high.u32 %v273
    %v276 = vmul.u32.u64.compose %v272, %v267
    %v277 = vextract.low.u32 %v276
    %v278 = vextract.high.u32 %v276
    %v279 = vmul.u32 %v272, %v263
    %v280 = vadd.s32 %v275, %v277
    %vm281 = vc.u32 %v275, %v277
    %v282 = vadd.s32 %v278, 1
    %v283 = vsel %vm281, %v282, %v278
    %v284 = vadd.s32 %v279, %v283
    %v285 = vadd.s32 %v284, 536870912
    %v286 = vshrl.u32 %v285, 30
    %v287 = vshll.u32 %v286, 30
    %v288 = vsub.s32 %v284, %v287
    %vm289 = vcmp.lt.s32.totalorder %v288, 0
    %v290 = vsub.s32 0, %v288
    %v291 = vsel %vm289, %v290, %v288
    %v292 = vclz %v291
    %v293 = vsub.s32 %v292, 2
    %vm294 = vcmp.gt.s32.totalorder 0, %v293
    %v295 = vsel %vm294, 0, %v293
    %v296 = vsub.s32 32, %v295
    %v297 = vshll.u32 %v288, %v295
    %v298 = vshrl.u32 %v280, %v296
    %v299 = vor.u32 %v297, %v298
    %v300 = vsub.s32 4294967266, %v295
    %v301 = vadd.s32 %v300, 127
    %v302 = vshll.u32 %v301, 23
    %v303 = vor.u32 4788187, %v302
    %v304 = vand.u32 2147483647, %v303
    %v306 = vcvt.s32.f32 %v299
    %v307 = vmul.f32 %v306, %v304
    %v308 = vxor.u32 %v307, 2147483648
    %v309 = vsel %vm226, %v308, %v307
    %v310 = vsub.s32 4, %v286
    %v311 = vsel %vm226, %v310, %v286
    %v312 = vsel %vm225, %v69, %v309
    %v313 = vsel %vm225, 0, %v311
    %v314 = vcosq.f32.pop %v312
    %v315 = vsinq.f32.pop %v312
    %vm316 = vweird.f32 %v69
    %v317 = vand.u32 %v313, 3
    %vm318 = vcmp.lt.s32.totalorder %v317, 2
    %vm319 = vcmp.eq.s32.totalorder %v317, 0
    %v320 = vxor.u32 %v315, 2147483648
    %v321 = vsel %vm319, %v314, %v320
    %vm322 = vcmp.eq.s32.totalorder %v317, 2
    %v323 = vxor.u32 %v314, 2147483648
    %v324 = vsel %vm322, %v323, %v315
    %v325 = vsel %vm318, %v321, %v324
    %v326 = vsel %vm316, nan, %v325
    %v327 = vmul.f32 %v77, %v223
    %v328 = vmul.f32 %v78, %v326
    %v329 = vmul.f32 %v327, 0.5
    %v330 = vmul.f32 %v328, 0.5
    %v331 = vand.u32 2147483647, %v68
    %vm332 = vcmp.le.f32.partialorder %v331, 0.7853982
    %vm333 = vcmp.lt.s32.totalorder %v68, 0
    %v334 = vand.u32 %v68, 2139095040
    %v335 = vshrl.u32 %v334, 23
    %v336 = vsub.s32 %v335, 127
    %v337 = vand.u32 2147483647, %v68
    %v338 = vand.u32 %v337, 8388607
    %v339 = vor.u32 %v338, 8388608
    %v340 = vsub.s32 0, %v339
    %v341 = vadd.s32 %v336, 1
    %vm342 = vcmp.gt.s32.totalorder %v341, 0
    %v343 = vsel %vm342, %v341, 0
    %v344 = vshrl.u32 %v343, 5
    %v345 = vand.u32 %v343, 31
    %v346 = vsub.s32 32, %v345
    %v347 = vshrl.u32 683565275, %v346
    %v348 = vshll.u32 683565275, %v345
    %v349 = vshrl.u32 2475754826, %v346
    %v350 = vor.u32 %v348, %v349
    %v351 = vshll.u32 2475754826, %v345
    %v352 = vshrl.u32 2131351028, %v346
    %v353 = vor.u32 %v351, %v352
    %v354 = vshll.u32 2131351028, %v345
    %v355 = vshrl.u32 2102212464, %v346
    %v356 = vor.u32 %v354, %v355
    %v357 = vshll.u32 2102212464, %v345
    %v358 = vshrl.u32 920167782, %v346
    %v359 = vor.u32 %v357, %v358
    %v360 = vshll.u32 920167782, %v345
    %v361 = vshrl.u32 1326507024, %v346
    %v362 = vor.u32 %v360, %v361
    %vm363 = vcmp.lt.s32.totalorder %v344, 1
    %vm364 = vcmp.lt.s32.totalorder %v344, 2
    %vm365 = vcmp.lt.s32.totalorder %v344, 3
    %vm366 = vcmp.lt.s32.totalorder %v344, 4
    %v367 = vsel %vm363, %v347, %v350
    %v368 = vsel %vm366, %v356, 2102212464
    %v369 = vsel %vm365, %v353, %v368
    %v370 = vsel %vm364, %v367, %v369
    %v371 = vsel %vm363, %v350, %v353
    %v372 = vsel %vm366, %v359, 920167782
    %v373 = vsel %vm365, %v356, %v372
    %v374 = vsel %vm364, %v371, %v373
    %v375 = vsel %vm363, %v353, %v356
    %v376 = vsel %vm366, %v362, 1326507024
    %v377 = vsel %vm365, %v359, %v376
    %v378 = vsel %vm364, %v375, %v377
    %v379 = vshll.u32 %v339, 8
    %v380 = vmul.u32.u64.compose %v379, %v378
    %v381 = vextract.low.u32 %v380
    %v382 = vextract.high.u32 %v380
    %v383 = vmul.u32.u64.compose %v379, %v374
    %v384 = vextract.low.u32 %v383
    %v385 = vextract.high.u32 %v383
    %v386 = vmul.u32 %v379, %v370
    %v387 = vadd.s32 %v382, %v384
    %vm388 = vc.u32 %v382, %v384
    %v389 = vadd.s32 %v385, 1
    %v390 = vsel %vm388, %v389, %v385
    %v391 = vadd.s32 %v386, %v390
    %v392 = vadd.s32 %v391, 536870912
    %v393 = vshrl.u32 %v392, 30
    %v394 = vshll.u32 %v393, 30
    %v395 = vsub.s32 %v391, %v394
    %vm396 = vcmp.lt.s32.totalorder %v395, 0
    %v397 = vsub.s32 0, %v395
    %v398 = vsel %vm396, %v397, %v395
    %v399 = vclz %v398
    %v400 = vsub.s32 %v399, 2
    %vm401 = vcmp.gt.s32.totalorder 0, %v400
    %v402 = vsel %vm401, 0, %v400
    %v403 = vsub.s32 32, %v402
    %v404 = vshll.u32 %v395, %v402
    %v405 = vshrl.u32 %v387, %v403
    %v406 = vor.u32 %v404, %v405
    %v407 = vsub.s32 4294967266, %v402
    %v408 = vadd.s32 %v407, 127
    %v409 = vshll.u32 %v408, 23
    %v410 = vor.u32 4788187, %v409
    %v411 = vand.u32 2147483647, %v410
    %v413 = vcvt.s32.f32 %v406
    %v414 = vmul.f32 %v413, %v411
    %v415 = vxor.u32 %v414, 2147483648
    %v416 = vsel %vm333, %v415, %v414
    %v417 = vsub.s32 4, %v393
    %v418 = vsel %vm333, %v417, %v393
    %v419 = vsel %vm332, %v68, %v416
    %v420 = vsel %vm332, 0, %v418
    %v421 = vcosq.f32.pop %v419
    %v422 = vsinq.f32.pop %v419
    %vm423 = vweird.f32 %v68
    %v424 = vadd.s32 %v420, 3
    %v425 = vand.u32 %v424, 3
    %vm426 = vcmp.lt.s32.totalorder %v425, 2
    %vm427 = vcmp.eq.s32.totalorder %v425, 0
    %v428 = vxor.u32 %v422, 2147483648
    %v429 = vsel %vm427, %v421, %v428
    %vm430 = vcmp.eq.s32.totalorder %v425, 2
    %v431 = vxor.u32 %v421, 2147483648
    %v432 = vsel %vm430, %v431, %v422
    %v433 = vsel %vm426, %v429, %v432
    %v434 = vsel %vm423, nan, %v433
    %v435 = vand.u32 2147483647, %v69
    %vm436 = vcmp.le.f32.partialorder %v435, 0.7853982
    %vm437 = vcmp.lt.s32.totalorder %v69, 0
    %v438 = vand.u32 %v69, 2139095040
    %v439 = vshrl.u32 %v438, 23
    %v440 = vsub.s32 %v439, 127
    %v441 = vand.u32 2147483647, %v69
    %v442 = vand.u32 %v441, 8388607
    %v443 = vor.u32 %v442, 8388608
    %v444 = vsub.s32 0, %v443
    %v445 = vadd.s32 %v440, 1
    %vm446 = vcmp.gt.s32.totalorder %v445, 0
    %v447 = vsel %vm446, %v445, 0
    %v448 = vshrl.u32 %v447, 5
    %v449 = vand.u32 %v447, 31
    %v450 = vsub.s32 32, %v449
    %v451 = vshrl.u32 683565275, %v450
    %v452 = vshll.u32 683565275, %v449
    %v453 = vshrl.u32 2475754826, %v450
    %v454 = vor.u32 %v452, %v453
    %v455 = vshll.u32 2475754826, %v449
    %v456 = vshrl.u32 2131351028, %v450
    %v457 = vor.u32 %v455, %v456
    %v458 = vshll.u32 2131351028, %v449
    %v459 = vshrl.u32 2102212464, %v450
    %v460 = vor.u32 %v458, %v459
    %v461 = vshll.u32 2102212464, %v449
    %v462 = vshrl.u32 920167782, %v450
    %v463 = vor.u32 %v461, %v462
    %v464 = vshll.u32 920167782, %v449
    %v465 = vshrl.u32 1326507024, %v450
    %v466 = vor.u32 %v464, %v465
    %vm467 = vcmp.lt.s32.totalorder %v448, 1
    %vm468 = vcmp.lt.s32.totalorder %v448, 2
    %vm469 = vcmp.lt.s32.totalorder %v448, 3
    %vm470 = vcmp.lt.s32.totalorder %v448, 4
    %v471 = vsel %vm467, %v451, %v454
    %v472 = vsel %vm470, %v460, 2102212464
    %v473 = vsel %vm469, %v457, %v472
    %v474 = vsel %vm468, %v471, %v473
    %v475 = vsel %vm467, %v454, %v457
    %v476 = vsel %vm470, %v463, 920167782
    %v477 = vsel %vm469, %v460, %v476
    %v478 = vsel %vm468, %v475, %v477
    %v479 = vsel %vm467, %v457, %v460
    %v480 = vsel %vm470, %v466, 1326507024
    %v481 = vsel %vm469, %v463, %v480
    %v482 = vsel %vm468, %v479, %v481
    %v483 = vshll.u32 %v443, 8
    %v484 = vmul.u32.u64.compose %v483, %v482
    %v485 = vextract.low.u32 %v484
    %v486 = vextract.high.u32 %v484
    %v487 = vmul.u32.u64.compose %v483, %v478
    %v488 = vextract.low.u32 %v487
    %v489 = vextract.high.u32 %v487
    %v490 = vmul.u32 %v483, %v474
    %v491 = vadd.s32 %v486, %v488
    %vm492 = vc.u32 %v486, %v488
    %v493 = vadd.s32 %v489, 1
    %v494 = vsel %vm492, %v493, %v489
    %v495 = vadd.s32 %v490, %v494
    %v496 = vadd.s32 %v495, 536870912
    %v497 = vshrl.u32 %v496, 30
    %v498 = vshll.u32 %v497, 30
    %v499 = vsub.s32 %v495, %v498
    %vm500 = vcmp.lt.s32.totalorder %v499, 0
    %v501 = vsub.s32 0, %v499
    %v502 = vsel %vm500, %v501, %v499
    %v503 = vclz %v502
    %v504 = vsub.s32 %v503, 2
    %vm505 = vcmp.gt.s32.totalorder 0, %v504
    %v506 = vsel %vm505, 0, %v504
    %v507 = vsub.s32 32, %v506
    %v508 = vshll.u32 %v499, %v506
    %v509 = vshrl.u32 %v491, %v507
    %v510 = vor.u32 %v508, %v509
    %v511 = vsub.s32 4294967266, %v506
    %v512 = vadd.s32 %v511, 127
    %v513 = vshll.u32 %v512, 23
    %v514 = vor.u32 4788187, %v513
    %v515 = vand.u32 2147483647, %v514
    %v517 = vcvt.s32.f32 %v510
    %v518 = vmul.f32 %v517, %v515
    %v519 = vxor.u32 %v518, 2147483648
    %v520 = vsel %vm437, %v519, %v518
    %v521 = vsub.s32 4, %v497
    %v522 = vsel %vm437, %v521, %v497
    %v523 = vsel %vm436, %v69, %v520
    %v524 = vsel %vm436, 0, %v522
    %v525 = vcosq.f32.pop %v523
    %v526 = vsinq.f32.pop %v523
    %vm527 = vweird.f32 %v69
    %v528 = vadd.s32 %v524, 3
    %v529 = vand.u32 %v528, 3
    %vm530 = vcmp.lt.s32.totalorder %v529, 2
    %vm531 = vcmp.eq.s32.totalorder %v529, 0
    %v532 = vxor.u32 %v526, 2147483648
    %v533 = vsel %vm531, %v525, %v532
    %vm534 = vcmp.eq.s32.totalorder %v529, 2
    %v535 = vxor.u32 %v525, 2147483648
    %v536 = vsel %vm534, %v535, %v526
    %v537 = vsel %vm530, %v533, %v536
    %v538 = vsel %vm527, nan, %v537
    %v539 = vmul.f32 %v77, %v434
    %v540 = vmul.f32 %v78, %v538
    %v541 = vmul.f32 %v539, 0.5
    %v542 = vmul.f32 %v540, 0.5
    %v543 = vsub.f32 %v50, %v329
    %v544 = vsub.f32 %v51, %v330
    %v545 = vsub.f32 %v59, %v541
    %v546 = vsub.f32 %v60, %v542
    %v547 = vadd.f32 %v50, %v329
    %v548 = vadd.f32 %v51, %v330
    %v549 = vadd.f32 %v59, %v541
    %v550 = vadd.f32 %v60, %v542
    %v551 = vsub.f32 %v543, %v84
    %v552 = vsub.f32 %v544, %v85
    %v553 = vsub.f32 %v545, %v91
    %v554 = vsub.f32 %v546, %v92
    %v555 = vmul.f32 %v551, %v551
    %v556 = vmul.f32 %v552, %v552
    %v557 = vmul.f32 %v553, %v553
    %v558 = vmul.f32 %v554, %v554
    %v559 = vadd.f32 %v555, %v557
    %v560 = vadd.f32 %v556, %v558
    %v561 = vsub.f32 %v543, %v98
    %v562 = vsub.f32 %v544, %v99
    %v563 = vsub.f32 %v545, %v105
    %v564 = vsub.f32 %v546, %v106
    %v565 = vmul.f32 %v561, %v561
    %v566 = vmul.f32 %v562, %v562
    %v567 = vmul.f32 %v563, %v563
    %v568 = vmul.f32 %v564, %v564
    %v569 = vadd.f32 %v565, %v567
    %v570 = vadd.f32 %v566, %v568
    %v571 = vsub.f32 %v547, %v84
    %v572 = vsub.f32 %v548, %v85
    %v573 = vsub.f32 %v549, %v91
    %v574 = vsub.f32 %v550, %v92
    %v575 = vmul.f32 %v571, %v571
    %v576 = vmul.f32 %v572, %v572
    %v577 = vmul.f32 %v573, %v573
    %v578 = vmul.f32 %v574, %v574
    %v579 = vadd.f32 %v575, %v577
    %v580 = vadd.f32 %v576, %v578
    %v581 = vsub.f32 %v547, %v98
    %v582 = vsub.f32 %v548, %v99
    %v583 = vsub.f32 %v549, %v105
    %v584 = vsub.f32 %v550, %v106
    %v585 = vmul.f32 %v581, %v581
    %v586 = vmul.f32 %v582, %v582
    %v587 = vmul.f32 %v583, %v583
    %v588 = vmul.f32 %v584, %v584
    %v589 = vadd.f32 %v585, %v587
    %v590 = vadd.f32 %v586, %v588
    %v591 = vmin.f32 %v559, %v569
    %v592 = vmin.f32 %v560, %v570
    %v593 = vmin.f32 %v579, %v589
    %v594 = vmin.f32 %v580, %v590
    %v595 = vmax.f32 %v591, %v593
    %v596 = vmax.f32 %v592, %v594
    %v597 = vmin.f32 %v559, %v579
    %v598 = vmin.f32 %v560, %v580
    %v599 = vmin.f32 %v569, %v589
    %v600 = vmin.f32 %v570, %v590
    %v601 = vmax.f32 %v597, %v599
    %v602 = vmax.f32 %v598, %v600
    %v603 = vmax.f32 %v595, %v601
    %v604 = vmax.f32 %v596, %v602
    %v605 = vld [vmem:[#allocation2] sm:$0xff]
    %v606 = vld [vmem:[#allocation2 + $0x8] sm:$0xff]
    %v607 = vrsqrt.pop %v603
    %v608 = vmul.f32 %v603, %v607
    %vm609 = vcmp.eq.f32.partialorder %v603, inf
    %v610 = vsel %vm609, %v603, %v608
    %vm611 = vcmp.eq.f32.partialorder %v603, 0.0
    %v612 = vand.u32 %v603, 2147483648
    %v613 = vsel %vm611, %v612, %v610
    %v614 = vrsqrt.pop %v604
    %v615 = vmul.f32 %v604, %v614
    %vm616 = vcmp.eq.f32.partialorder %v604, inf
    %v617 = vsel %vm616, %v604, %v615
    %vm618 = vcmp.eq.f32.partialorder %v604, 0.0
    %v619 = vand.u32 %v604, 2147483648
    %v620 = vsel %vm618, %v619, %v617
    %v621 = vmul.f32 %v119, %v613
    %v622 = vmul.f32 %v120, %v620
    %v623 = vadd.f32 %v605, %v621
    %v624 = vadd.f32 %v606, %v622
    %625 = vst [vmem:[#allocation2] sm:$0xff] %v623
    %626 = vst [vmem:[#allocation2 + $0x8] sm:$0xff] %v624
    %v627 = vsub.f32 %v41, %v112
    %v628 = vsub.f32 %v42, %v113
    %v629 = vmul.f32 %v627, %v627
    %v630 = vmul.f32 %v628, %v628
    %v631 = vld [vmem:[#allocation4] sm:$0xff]
    %v632 = vld [vmem:[#allocation4 + $0x8] sm:$0xff]
    %v633 = vadd.f32 %v631, %v629
    %v634 = vadd.f32 %v632, %v630
    %635 = vst [vmem:[#allocation4] sm:$0xff] %v633
    %636 = vst [vmem:[#allocation4 + $0x8] sm:$0xff] %v634
    %v637 = vld [vmem:[#allocation3] sm:$0xff]
    %v638 = vld [vmem:[#allocation3 + $0x8] sm:$0xff]
    %v639 = vmul.f32 %v119, %v629
    %v640 = vmul.f32 %v120, %v630
    %v641 = vadd.f32 %v637, %v639
    %v642 = vadd.f32 %v638, %v640
    %643 = vst [vmem:[#allocation3] sm:$0xff] %v641
    %644 = vst [vmem:[#allocation3 + $0x8] sm:$0xff] %v642
    // Predicated region
    $region14: #{tpu_custom_call.1} parent=1 // pred_check
      %p645 = pneg %p29
    $region15: #{tpu_custom_call.1} parent=1 // pred_check_branch
      %647 = sbr.rel (%p645) target = $region17
    $region16: #{tpu_custom_call.1} parent=1 // pred_region
      %v648 = vld [vmem:[#allocation2] sm:$0xff]
      %v649 = vld [vmem:[#allocation2 + $0x8] sm:$0xff]
      %v650 = vadd.f32 %v648, %v649
      %651 = vadd.xlane.f32.xlu0 %v650
      %v652 = vpop.xlane.xlu0 %651
      %v653 = vrot.slane %v652, 4
      %v654 = vadd.f32 %v652, %v653
      %v655 = vrot.slane %v654, 2
      %v656 = vadd.f32 %v654, %v655
      %v657 = vrot.slane %v656, 1
      %v658 = vadd.f32 %v656, %v657
      %s659 = vtos %v658
      %v660 = vld [vmem:[#allocation3] sm:$0xff]
      %v661 = vld [vmem:[#allocation3 + $0x8] sm:$0xff]
      %v662 = vadd.f32 %v660, %v661
      %663 = vadd.xlane.f32.xlu0 %v662
      %v664 = vpop.xlane.xlu0 %663
      %v665 = vrot.slane %v664, 4
      %v666 = vadd.f32 %v664, %v665
      %v667 = vrot.slane %v666, 2
      %v668 = vadd.f32 %v666, %v667
      %v669 = vrot.slane %v668, 1
      %v670 = vadd.f32 %v668, %v669
      %s671 = vtos %v670
      %v672 = vld [vmem:[#allocation4] sm:$0xff]
      %v673 = vld [vmem:[#allocation4 + $0x8] sm:$0xff]
      %v674 = vadd.f32 %v672, %v673
      %675 = vadd.xlane.f32.xlu0 %v674
      %v676 = vpop.xlane.xlu0 %675
      %v677 = vrot.slane %v676, 4
      %v678 = vadd.f32 %v676, %v677
      %v679 = vrot.slane %v678, 2
      %v680 = vadd.f32 %v678, %v679
      %v681 = vrot.slane %v680, 1
      %v682 = vadd.f32 %v680, %v681
      %s683 = vtos %v682
      %v684 = vlaneseq
      %v685 = vshrl.u32 %v684, 7
      %v686 = vlaneseq
      %v687 = vand.u32 %v686, 127
      %vm688 = vcmp.eq.s32.totalorder %v685, 0
      %vm689 = vcmp.eq.s32.totalorder %v687, 0
      %vm690 = vmand %vm688, %vm689
      %vm691 = vcmp.eq.s32.totalorder %v687, 1
      %vm692 = vmand %vm688, %vm691
      %vm693 = vcmp.eq.s32.totalorder %v687, 2
      %vm694 = vmand %vm688, %vm693
      %v695 = vstv %s683
      %v696 = vsel %vm694, %v695, 0.0
      %v697 = vstv %s671
      %v698 = vsel %vm692, %v697, %v696
      %v699 = vstv %s659
      %v700 = vsel %vm690, %v699, %v698
      %701 = vst [vmem:[#allocation8] sm:$0xff] %v700
    $region17: #{tpu_custom_call.1} parent=1 // pred_fallthru
      _
    // Predicated region
    $region18: #{tpu_custom_call.1} parent=1 // pred_check
      _
    $region19: #{tpu_custom_call.1} parent=1 // pred_check_branch
      %703 = sbr.rel (0) target = $region21
    $region20: #{tpu_custom_call.1} parent=1 // pred_region
      %s705 = ssub.s32 128, 128
      %706 = vsyncadd [#allocation7], %s705
      %s708 = sshll.u32 [#allocation8], 4
      %s709 = int_to_ptr.vmem [resolvable:$true] %s708
      %711 = dma.vmem_to_hbm [thread:$0]  %s709, 128, %s1, [#allocation7]
    $region21: #{tpu_custom_call.1} parent=1 // pred_fallthru
      _
    // Predicated region
    $region22: #{tpu_custom_call.1} parent=1 // pred_check
      _
    $region23: #{tpu_custom_call.1} parent=1 // pred_check_branch
      %713 = sbr.rel (0) target = $region25
    $region24: #{tpu_custom_call.1} parent=1 // pred_region
      %714 = dma.done [#allocation7], 128
    $region25: #{tpu_custom_call.1} parent=1 // pred_fallthru
      _
    %715 = vsyncpa [#allocation6], 1
    %716 = vsyncpa [#allocation7], 1

</llo_original>
